<compile_context>
chip_gen: v7x
topology: tpu7x:2x2x1
jax: 0.10.0
libtpu: 0.0.40
codegen_flags: <defaults>
</compile_context>

<pallas_src>
import functools

import jax
import jax.numpy as jnp
from jax.experimental import pallas as pl
from jax.experimental.pallas import tpu as pltpu

ELU_ALPHA = 0.1
BN_EPS = 1e-5


def _round_up(x, m):
    return (x + m - 1) // m * m


def _regressor_kernel(x_ref, w1_ref, p_ref, o_ref, stats_ref, *, batch, tile_b):
    """Grid = (phase, batch_tile). p_ref rows: 0=b1, 1=gamma, 2=beta, 3=w2, 4=b2 (lane 0)."""
    phase = pl.program_id(0)
    tile = pl.program_id(1)

    # h = ELU(x @ W1 + b1), recomputed in both phases (x is only D_in wide -> cheap).
    x = x_ref[...].astype(jnp.bfloat16)
    h = jnp.dot(x, w1_ref[...], preferred_element_type=jnp.float32)
    h = h + p_ref[0:1, :]
    # Activations stay f32, so exp(h)-1 is accurate enough here (expm1 only matters for bf16).
    h = jnp.where(h > 0, h, ELU_ALPHA * (jnp.exp(h) - 1.0))

    @pl.when(phase == 0)
    def _accumulate_stats():
        @pl.when(tile == 0)
        def _init():
            stats_ref[...] = jnp.zeros_like(stats_ref)

        # Mask batch-padding rows so BN statistics cover exactly the real batch.
        row = tile * tile_b + jax.lax.broadcasted_iota(jnp.int32, (tile_b, 1), 0)
        hm = jnp.where(row < batch, h, 0.0)
        stats_ref[0:1, :] = stats_ref[0:1, :] + jnp.sum(hm, axis=0, keepdims=True)
        stats_ref[1:2, :] = stats_ref[1:2, :] + jnp.sum(hm * hm, axis=0, keepdims=True)

    @pl.when(phase == 1)
    def _apply():
        inv_b = 1.0 / batch
        mean = stats_ref[0:1, :] * inv_b
        var = jnp.maximum(stats_ref[1:2, :] * inv_b - mean * mean, 0.0)
        gamma = p_ref[1:2, :]
        beta = p_ref[2:3, :]
        w2 = p_ref[3:4, :]
        scale = jax.lax.rsqrt(var + BN_EPS) * gamma          # (1, H_pad)
        w_eff = scale * w2                                   # folded BN * Linear2 weight
        # Scalar effective bias: b2 + sum_h (beta - mean*scale) * w2   (b2 lives in row 4, lane 0).
        b_eff = jnp.sum((beta - mean * scale) * w2 + p_ref[4:5, :], axis=1, keepdims=True)
        out = jnp.sum(h * w_eff, axis=1, keepdims=True) + b_eff     # (tile_b, 1), VPU + lane reduce
        o_ref[...] = out.astype(o_ref.dtype)


def regressor_forward(x, w1_packed, p_packed):
    """x: (B, D_in) f32; w1_packed: (D_in, H_pad) bf16; p_packed: (8, H_pad) f32.
    Returns (B, 1) f32 — same semantics as PyTorch Regressor.forward (training-mode BN)."""
    B, D_in = x.shape
    H_pad = w1_packed.shape[1]

    tile_b = 512 if B > 512 else _round_up(B, 8)
    B_pad = _round_up(B, tile_b)
    n_tiles = B_pad // tile_b
    if B_pad != B:
        x = jnp.pad(x, ((0, B_pad - B), (0, 0)))

    kernel = functools.partial(_regressor_kernel, batch=B, tile_b=tile_b)

    out = pl.pallas_call(
        kernel,
        out_shape=jax.ShapeDtypeStruct((B_pad, 1), jnp.float32),
        grid=(2, n_tiles),
        in_specs=[
            pl.BlockSpec((tile_b, D_in), lambda ph, ib: (ib, 0)),   # x tile (both phases)
            pl.BlockSpec((D_in, H_pad), lambda ph, ib: (0, 0)),     # W1, VMEM-resident
            pl.BlockSpec((8, H_pad), lambda ph, ib: (0, 0)),        # packed small params
        ],
        # Phase 0 pins the (never-written) output buffer to block 0; phase 1 writes block ib.
        out_specs=pl.BlockSpec((tile_b, 1), lambda ph, ib: (ph * ib, 0)),
        scratch_shapes=[pltpu.VMEM((2, H_pad), jnp.float32)],        # [sum; sumsq] per feature
        compiler_params=pltpu.CompilerParams(
            dimension_semantics=("arbitrary", "arbitrary")),
    )(x, w1_packed, p_packed)
    return out[:B]


def init_params(key, num_input_dim, num_hidden_dim):
    """PyTorch-default-style init: Linear uniform(+-1/sqrt(fan_in)), BN weight=1 bias=0."""
    k1, k2, k3, k4 = jax.random.split(key, 4)
    bound1 = 1.0 / jnp.sqrt(num_input_dim)
    bound2 = 1.0 / jnp.sqrt(num_hidden_dim)
    return {
        "w1": jax.random.uniform(k1, (num_input_dim, num_hidden_dim), jnp.float32, -bound1, bound1),
        "b1": jax.random.uniform(k2, (num_hidden_dim,), jnp.float32, -bound1, bound1),
        "gamma": jnp.ones((num_hidden_dim,), jnp.float32),
        "beta": jnp.zeros((num_hidden_dim,), jnp.float32),
        "w2": jax.random.uniform(k3, (num_hidden_dim,), jnp.float32, -bound2, bound2),
        "b2": jax.random.uniform(k4, (), jnp.float32, -bound2, bound2),
    }


def pack_params(params):
    """Pad hidden dim to a multiple of 128 and pack the tiny per-feature params into one array."""
    D_in, H = params["w1"].shape
    H_pad = _round_up(H, 128)
    w1 = jnp.zeros((D_in, H_pad), jnp.float32).at[:, :H].set(params["w1"]).astype(jnp.bfloat16)
    p = jnp.zeros((8, H_pad), jnp.float32)
    p = p.at[0, :H].set(params["b1"])
    p = p.at[1, :H].set(params["gamma"])
    p = p.at[2, :H].set(params["beta"])
    p = p.at[3, :H].set(params["w2"])
    p = p.at[4, 0].set(params["b2"])
    return w1, p


def reference_forward(x, params):
    """Pure-JAX reference of the PyTorch forward (training-mode BatchNorm1d).
    Mirrors the kernel's bf16 MXU inputs for the first matmul (f32 accumulation)."""
    h = jnp.dot(x.astype(jnp.bfloat16), params["w1"].astype(jnp.bfloat16),
                preferred_element_type=jnp.float32) + params["b1"]
    h = jnp.where(h > 0, h, ELU_ALPHA * (jnp.exp(h) - 1.0))
    mean = jnp.mean(h, axis=0, keepdims=True)
    var = jnp.mean((h - mean) ** 2, axis=0, keepdims=True)
    h = (h - mean) * jax.lax.rsqrt(var + BN_EPS) * params["gamma"] + params["beta"]
    return h @ params["w2"].reshape(-1, 1) + params["b2"]


if __name__ == "__main__":
    B, D_IN, H = 8, 32, 64  # small shapes consistent with Linear(D_in, H) -> ... -> Linear(H, 1)

    key = jax.random.PRNGKey(0)
    kx, kp = jax.random.split(key)
    x = jax.random.normal(kx, (B, D_IN), jnp.float32)
    params = init_params(kp, D_IN, H)
    w1_packed, p_packed = pack_params(params)

    out = jax.block_until_ready(regressor_forward(x, w1_packed, p_packed))
    ref = reference_forward(x, params)

    assert out.shape == (B, 1), out.shape
    assert jnp.allclose(out, ref, atol=1e-3, rtol=1e-3), float(jnp.max(jnp.abs(out - ref)))

    print("KERNEL_OK")
</pallas_src>

<mosaic_0001>
module attributes {stable_mosaic.version = 11 : i64} {
  func.func @_regressor_kernel(%arg0: i32, %arg1: i32, %arg2: memref<8x32xf32, #tpu.memory_space<vmem>>, %arg3: memref<32x128xbf16, #tpu.memory_space<vmem>>, %arg4: memref<8x128xf32, #tpu.memory_space<vmem>>, %arg5: memref<8x1xf32, #tpu.memory_space<vmem>>, %arg6: memref<2x128xf32, #tpu.memory_space<vmem>>) attributes {dimension_semantics = [#tpu.dimension_semantics<arbitrary>, #tpu.dimension_semantics<arbitrary>], iteration_bounds = array<i64: 2, 1>, scalar_prefetch = 0 : i64, scratch_operands = 1 : i64, tpu.core_type = #tpu.core_type<tc>, window_params = [{transform_indices = @transform_0, window_bounds = array<i64: 8, 32>}, {pipeline_mode = #tpu.pipeline_mode<synchronous>, transform_indices = @transform_1, window_bounds = array<i64: 32, 128>}, {pipeline_mode = #tpu.pipeline_mode<synchronous>, transform_indices = @transform_2, window_bounds = array<i64: 8, 128>}, {transform_indices = @transform_3, window_bounds = array<i64: 8, 1>}]} {
    %c0 = arith.constant 0 : index
    %c0_0 = arith.constant 0 : index
    %0 = vector.load %arg2[%c0, %c0_0] : memref<8x32xf32, #tpu.memory_space<vmem>>, vector<8x32xf32>
    %1 = arith.truncf %0 : vector<8x32xf32> to vector<8x32xbf16>
    %c0_1 = arith.constant 0 : index
    %c0_2 = arith.constant 0 : index
    %2 = vector.load %arg3[%c0_1, %c0_2] : memref<32x128xbf16, #tpu.memory_space<vmem>>, vector<32x128xbf16>
    %cst = arith.constant dense<0.000000e+00> : vector<8x128xf32>
    %3 = tpu.matmul %1, %2, %cst {dimension_numbers = #tpu.dot_dimension_numbers<[1], [0], [0], [1], [0, 0, 1, 1], [], []>} : vector<8x32xbf16>, vector<32x128xbf16>, vector<8x128xf32> -> vector<8x128xf32>
    %c0_3 = arith.constant 0 : index
    %c0_4 = arith.constant 0 : index
    %4 = vector.load %arg4[%c0_3, %c0_4] : memref<8x128xf32, #tpu.memory_space<vmem>>, vector<1x128xf32>
    %5 = vector.broadcast %4 : vector<1x128xf32> to vector<8x128xf32>
    %6 = arith.addf %3, %5 : vector<8x128xf32>
    %cst_5 = arith.constant 0.000000e+00 : f32
    %7 = vector.broadcast %cst_5 : f32 to vector<8x128xf32>
    %8 = arith.cmpf ogt, %6, %7 : vector<8x128xf32>
    %9 = math.exp %6 : vector<8x128xf32>
    %cst_6 = arith.constant 1.000000e+00 : f32
    %10 = vector.broadcast %cst_6 : f32 to vector<8x128xf32>
    %11 = arith.subf %9, %10 : vector<8x128xf32>
    %cst_7 = arith.constant 1.000000e-01 : f32
    %12 = vector.broadcast %cst_7 : f32 to vector<8x128xf32>
    %13 = arith.mulf %12, %11 : vector<8x128xf32>
    %14 = arith.select %8, %6, %13 : vector<8x128xi1>, vector<8x128xf32>
    %c0_i32 = arith.constant 0 : i32
    %15 = arith.cmpi eq, %arg0, %c0_i32 : i32
    %16 = arith.extui %15 : i1 to i32
    %c0_i32_8 = arith.constant 0 : i32
    %17 = arith.cmpi ne, %16, %c0_i32_8 : i32
    scf.if %17 {
      %c0_i32_10 = arith.constant 0 : i32
      %21 = arith.cmpi eq, %arg1, %c0_i32_10 : i32
      %22 = arith.extui %21 : i1 to i32
      %c0_i32_11 = arith.constant 0 : i32
      %23 = arith.cmpi ne, %22, %c0_i32_11 : i32
      scf.if %23 {
        %cst_23 = arith.constant 0.000000e+00 : f32
        %45 = vector.broadcast %cst_23 : f32 to vector<2x128xf32>
        %c0_24 = arith.constant 0 : index
        %c0_25 = arith.constant 0 : index
        %46 = vector.load %arg6[%c0_24, %c0_25] : memref<2x128xf32, #tpu.memory_space<vmem>>, vector<2x128xf32>
        tpu.vector_store %arg6[%c0_24, %c0_25], %45 {strides = array<i32>} : memref<2x128xf32, #tpu.memory_space<vmem>>, vector<2x128xf32>,
      } else {
      }
      %c8_i32 = arith.constant 8 : i32
      %24 = arith.muli %arg1, %c8_i32 : i32
      %25 = tpu.iota {dimensions = array<i32: 0>} : vector<8x1xi32>
      %26 = vector.broadcast %24 : i32 to vector<8x1xi32>
      %27 = arith.addi %26, %25 : vector<8x1xi32>
      %c8_i32_12 = arith.constant 8 : i32
      %28 = vector.broadcast %c8_i32_12 : i32 to vector<8x1xi32>
      %29 = arith.cmpi slt, %27, %28 : vector<8x1xi32>
      %cst_13 = arith.constant 0.000000e+00 : f32
      %30 = vector.shape_cast %29 : vector<8x1xi1> to vector<8x1xi1>
      %31 = vector.broadcast %30 : vector<8x1xi1> to vector<8x128xi1>
      %32 = vector.broadcast %cst_13 : f32 to vector<8x128xf32>
      %33 = arith.select %31, %14, %32 : vector<8x128xi1>, vector<8x128xf32>
      %c0_14 = arith.constant 0 : index
      %c0_15 = arith.constant 0 : index
      %34 = vector.load %arg6[%c0_14, %c0_15] : memref<2x128xf32, #tpu.memory_space<vmem>>, vector<1x128xf32>
      %cst_16 = arith.constant dense<0.000000e+00> : vector<128xf32>
      %35 = vector.multi_reduction <add>, %33, %cst_16 [0] : vector<8x128xf32> to vector<128xf32>
      %36 = vector.shape_cast %35 : vector<128xf32> to vector<1x128xf32>
      %37 = arith.addf %34, %36 : vector<1x128xf32>
      %c0_17 = arith.constant 0 : index
      %c0_18 = arith.constant 0 : index
      %38 = vector.load %arg6[%c0_17, %c0_18] : memref<2x128xf32, #tpu.memory_space<vmem>>, vector<1x128xf32>
      tpu.vector_store %arg6[%c0_17, %c0_18], %37 {strides = array<i32>} : memref<2x128xf32, #tpu.memory_space<vmem>>, vector<1x128xf32>,
      %c1 = arith.constant 1 : index
      %c0_19 = arith.constant 0 : index
      %39 = vector.load %arg6[%c1, %c0_19] : memref<2x128xf32, #tpu.memory_space<vmem>>, vector<1x128xf32>
      %40 = arith.mulf %33, %33 : vector<8x128xf32>
      %cst_20 = arith.constant dense<0.000000e+00> : vector<128xf32>
      %41 = vector.multi_reduction <add>, %40, %cst_20 [0] : vector<8x128xf32> to vector<128xf32>
      %42 = vector.shape_cast %41 : vector<128xf32> to vector<1x128xf32>
      %43 = arith.addf %39, %42 : vector<1x128xf32>
      %c1_21 = arith.constant 1 : index
      %c0_22 = arith.constant 0 : index
      %44 = vector.load %arg6[%c1_21, %c0_22] : memref<2x128xf32, #tpu.memory_space<vmem>>, vector<1x128xf32>
      tpu.vector_store %arg6[%c1_21, %c0_22], %43 {strides = array<i32>} : memref<2x128xf32, #tpu.memory_space<vmem>>, vector<1x128xf32>,
    } else {
    }
    %c1_i32 = arith.constant 1 : i32
    %18 = arith.cmpi eq, %arg0, %c1_i32 : i32
    %19 = arith.extui %18 : i1 to i32
    %c0_i32_9 = arith.constant 0 : i32
    %20 = arith.cmpi ne, %19, %c0_i32_9 : i32
    scf.if %20 {
      %c0_10 = arith.constant 0 : index
      %c0_11 = arith.constant 0 : index
      %21 = vector.load %arg6[%c0_10, %c0_11] : memref<2x128xf32, #tpu.memory_space<vmem>>, vector<1x128xf32>
      %cst_12 = arith.constant 1.250000e-01 : f32
      %22 = vector.broadcast %cst_12 : f32 to vector<1x128xf32>
      %23 = arith.mulf %21, %22 : vector<1x128xf32>
      %c1 = arith.constant 1 : index
      %c0_13 = arith.constant 0 : index
      %24 = vector.load %arg6[%c1, %c0_13] : memref<2x128xf32, #tpu.memory_space<vmem>>, vector<1x128xf32>
      %cst_14 = arith.constant 1.250000e-01 : f32
      %25 = vector.broadcast %cst_14 : f32 to vector<1x128xf32>
      %26 = arith.mulf %24, %25 : vector<1x128xf32>
      %27 = arith.mulf %23, %23 : vector<1x128xf32>
      %28 = arith.subf %26, %27 : vector<1x128xf32>
      %cst_15 = arith.constant 0.000000e+00 : f32
      %29 = vector.broadcast %cst_15 : f32 to vector<1x128xf32>
      %30 = arith.maximumf %28, %29 : vector<1x128xf32>
      %c1_16 = arith.constant 1 : index
      %c0_17 = arith.constant 0 : index
      %31 = vector.load %arg4[%c1_16, %c0_17] : memref<8x128xf32, #tpu.memory_space<vmem>>, vector<1x128xf32>
      %c2 = arith.constant 2 : index
      %c0_18 = arith.constant 0 : index
      %32 = vector.load %arg4[%c2, %c0_18] : memref<8x128xf32, #tpu.memory_space<vmem>>, vector<1x128xf32>
      %c3 = arith.constant 3 : index
      %c0_19 = arith.constant 0 : index
      %33 = vector.load %arg4[%c3, %c0_19] : memref<8x128xf32, #tpu.memory_space<vmem>>, vector<1x128xf32>
      %cst_20 = arith.constant 9.99999974E-6 : f32
      %34 = vector.broadcast %cst_20 : f32 to vector<1x128xf32>
      %35 = arith.addf %30, %34 : vector<1x128xf32>
      %36 = math.rsqrt %35 : vector<1x128xf32>
      %37 = arith.mulf %36, %31 : vector<1x128xf32>
      %38 = arith.mulf %37, %33 : vector<1x128xf32>
      %39 = arith.mulf %23, %37 : vector<1x128xf32>
      %40 = arith.subf %32, %39 : vector<1x128xf32>
      %41 = arith.mulf %40, %33 : vector<1x128xf32>
      %c4 = arith.constant 4 : index
      %c0_21 = arith.constant 0 : index
      %42 = vector.load %arg4[%c4, %c0_21] : memref<8x128xf32, #tpu.memory_space<vmem>>, vector<1x128xf32>
      %43 = arith.addf %41, %42 : vector<1x128xf32>
      %cst_22 = arith.constant dense<0.000000e+00> : vector<1xf32>
      %44 = vector.multi_reduction <add>, %43, %cst_22 [1] : vector<1x128xf32> to vector<1xf32>
      %45 = vector.shape_cast %44 : vector<1xf32> to vector<1x1xf32>
      %46 = vector.broadcast %38 : vector<1x128xf32> to vector<8x128xf32>
      %47 = arith.mulf %14, %46 : vector<8x128xf32>
      %cst_23 = arith.constant dense<0.000000e+00> : vector<8xf32>
      %48 = vector.multi_reduction <add>, %47, %cst_23 [1] : vector<8x128xf32> to vector<8xf32>
      %49 = vector.shape_cast %48 : vector<8xf32> to vector<8x1xf32>
      %50 = vector.broadcast %45 : vector<1x1xf32> to vector<8x1xf32>
      %51 = arith.addf %49, %50 : vector<8x1xf32>
      %c0_24 = arith.constant 0 : index
      %c0_25 = arith.constant 0 : index
      %52 = vector.load %arg5[%c0_24, %c0_25] : memref<8x1xf32, #tpu.memory_space<vmem>>, vector<8x1xf32>
      tpu.vector_store %arg5[%c0_24, %c0_25], %51 {strides = array<i32>} : memref<8x1xf32, #tpu.memory_space<vmem>>, vector<8x1xf32>,
    } else {
    }
    return
  }
  func.func @transform_0(%arg0: i32, %arg1: i32) -> (i32, i32) {
    %c0_i32 = arith.constant 0 : i32
    %c0_i32_0 = arith.constant 0 : i32
    return %arg1, %c0_i32 : i32, i32
  }
  func.func @transform_1(%arg0: i32, %arg1: i32) -> (i32, i32) {
    %c0_i32 = arith.constant 0 : i32
    %c0_i32_0 = arith.constant 0 : i32
    %c0_i32_1 = arith.constant 0 : i32
    return %c0_i32, %c0_i32_0 : i32, i32
  }
  func.func @transform_2(%arg0: i32, %arg1: i32) -> (i32, i32) {
    %c0_i32 = arith.constant 0 : i32
    %c0_i32_0 = arith.constant 0 : i32
    %c0_i32_1 = arith.constant 0 : i32
    return %c0_i32, %c0_i32_0 : i32, i32
  }
  func.func @transform_3(%arg0: i32, %arg1: i32) -> (i32, i32) {
    %0 = arith.muli %arg0, %arg1 : i32
    %c0_i32 = arith.constant 0 : i32
    %c0_i32_0 = arith.constant 0 : i32
    return %0, %c0_i32 : i32, i32
  }
}

</mosaic_0001>

<llo_original>
// kernel: tpu_custom_call.1
$region0: #{tpu_custom_call.1}
  #allocation0 [shape = 'u32[]', space=smem, size = 0x4, offset = 0x4, fixed_abs, tag = 'smem constant byte address 0x4 - core index']
  #allocation1 [shape = 'u32[144,128]{1,0:T(1,128)}', space=vmem, size = 0x12000, scoped, tag = 'internal scratch']
  #allocation2 [shape = 'f32[2,128]{1,0:T(2,128)}', space=vmem, size = 0x400, scoped, tag = 'scratch operand']
  %s0 = inlined_call_operand.hbm [shape: f32[8,32], index: 0, kind: input, shape index: {}]
  %s1 = inlined_call_operand.hbm [shape: bf16[32,128], index: 1, kind: input, shape index: {}]
  %s2 = inlined_call_operand.hbm [shape: f32[8,128], index: 2, kind: input, shape index: {}]
  %s3 = inlined_call_operand.vmem [shape: f32[8,1], index: 3, kind: output, shape index: {}]
  %s4 = sld [smem:[#allocation0]]
  $region69: #{tpu_custom_call.1} parent=0
    _
  %s6 = ssub.s32 1, %s4
  %s7 = scalar_select 0, %s6, %s4
  $region1: #{tpu_custom_call.1} parent=0
    #allocation3 [shape = 'u8[4096]{0}', space=vmem, size = 0x1000, scoped, tag = 'input window, operand 0, single buffered']
    #allocation4 [shape = 's32[2]{0}', space=sflag, size = 0x8, scoped, tag = 'scoped memory for tpu_custom_call.1']
    #allocation5 [shape = 'u8[8192]{0}', space=vmem, size = 0x2000, scoped, tag = 'input window, operand 1, single buffered']
    #allocation6 [shape = 's32[1]{0}', space=sflag, size = 0x4, scoped, tag = 'scoped memory for tpu_custom_call.1']
    #allocation7 [shape = 'u8[4096]{0}', space=vmem, size = 0x1000, scoped, tag = 'input window, operand 2, single buffered']
    %8 = vsyncpa [#allocation4], 0
    %9 = vsyncpa [#allocation6], 0
    loop: start=0, step=1, limit=4
    $region2: #{tpu_custom_call.1} parent=1 // loop_pre_header
      _
    $region3: #{tpu_custom_call.1} parent=1 // loop_header
      %s11 = sphi 0, %s15
      %p12 = scmp.ge.s32.totalorder %s11, 4
      %s18 = sphi 0, %s30
      %s19 = sphi 0, %s26
      %s20 = sphi 0, %s18
      %s21 = sphi 0, %s19
      %s22 = sphi 0, %s20
      %s23 = sphi 0, %s21
      %s33 = sphi 0, %s35
      %s36 = sphi 0, %s33
      %s37 = sphi 0, %s36
      %s53 = sphi 0, %s37
      %s57 = sphi 0, %s57
      %s59 = sphi 0, %s57
      %s60 = sphi 0, %s59
      %s74 = sphi 0, %s60
      %s78 = sphi 0, %s78
      %s80 = sphi 0, %s78
      %s81 = sphi 0, %s80
      %s95 = sphi 0, %s81
      %s103 = sphi 0, %s105
      %s106 = sphi 0, %s103
      %s107 = sphi 0, %s106
      %s123 = sphi 0, %s107
    $region4: #{tpu_custom_call.1} parent=1 // loop_header_branch
      %14 = sbr.rel (%p12) target = $region8
    $region5: #{tpu_custom_call.1} parent=1 // loop_body
      %s16 = ssub.s32 %s11, 1
      %s17 = ssub.s32 %s11, 2
      %s24 = sadd.s32 1, %s19
      %p25 = scmp.ge.s32.totalorder %s24, 1
      %s26 = scalar_select %p25, 0, %s24
      %s27 = sadd.s32 1, %s18
      %s28 = scalar_select %p25, %s27, %s18
      %p29 = scmp.ge.s32.totalorder %s28, 2
      %s30 = scalar_select %p29, 0, %s28
      %s31 = ssub.s32 %s19, %s26
      %p32 = scmp.eq.s32.totalorder %s31, 0
      %s34 = sadd.s32 %s33, 1
      %s35 = scalar_select %p32, %s33, %s34
      %p38 = pneg %p32
      %p39 = scmp.eq.s32.totalorder %s11, 1
      %p40 = por %p38, %p39
      %p41 = scmp.ne.s32.totalorder %s33, %s36
      %p42 = scmp.eq.s32.totalorder %s11, 0
      %p43 = por %p41, %p42
      %p44 = scmp.ne.s32.totalorder %s33, %s36
      %p45 = scmp.eq.s32.totalorder %s16, 1
      %p46 = por %p44, %p45
      %p47 = scmp.ne.s32.totalorder %s36, %s37
      %p48 = scmp.eq.s32.totalorder %s16, 0
      %p49 = por %p47, %p48
      %p50 = scmp.ne.s32.totalorder %s36, %s37
      %p51 = scmp.eq.s32.totalorder %s17, 1
      %p52 = por %p50, %p51
      %p54 = scmp.ne.s32.totalorder %s37, %s53
      %p55 = scmp.eq.s32.totalorder %s17, 0
      %p56 = por %p54, %p55
      %s58 = sadd.s32 %s57, 1
      %p61 = scmp.eq.s32.totalorder %s11, 1
      %p62 = scmp.ne.s32.totalorder %s57, %s59
      %p63 = scmp.eq.s32.totalorder %s11, 0
      %p64 = por %p62, %p63
      %p65 = scmp.ne.s32.totalorder %s57, %s59
      %p66 = scmp.eq.s32.totalorder %s16, 1
      %p67 = por %p65, %p66
      %p68 = scmp.ne.s32.totalorder %s59, %s60
      %p69 = scmp.eq.s32.totalorder %s16, 0
      %p70 = por %p68, %p69
      %p71 = scmp.ne.s32.totalorder %s59, %s60
      %p72 = scmp.eq.s32.totalorder %s17, 1
      %p73 = por %p71, %p72
      %p75 = scmp.ne.s32.totalorder %s60, %s74
      %p76 = scmp.eq.s32.totalorder %s17, 0
      %p77 = por %p75, %p76
      %s79 = sadd.s32 %s78, 1
      %p82 = scmp.eq.s32.totalorder %s11, 1
      %p83 = scmp.ne.s32.totalorder %s78, %s80
      %p84 = scmp.eq.s32.totalorder %s11, 0
      %p85 = por %p83, %p84
      %p86 = scmp.ne.s32.totalorder %s78, %s80
      %p87 = scmp.eq.s32.totalorder %s16, 1
      %p88 = por %p86, %p87
      %p89 = scmp.ne.s32.totalorder %s80, %s81
      %p90 = scmp.eq.s32.totalorder %s16, 0
      %p91 = por %p89, %p90
      %p92 = scmp.ne.s32.totalorder %s80, %s81
      %p93 = scmp.eq.s32.totalorder %s17, 1
      %p94 = por %p92, %p93
      %p96 = scmp.ne.s32.totalorder %s81, %s95
      %p97 = scmp.eq.s32.totalorder %s17, 0
      %p98 = por %p96, %p97
      %s99 = smul.u32 %s18, %s19
      %s100 = smul.u32 %s30, %s26
      %s101 = ssub.s32 %s99, %s100
      %p102 = scmp.eq.s32.totalorder %s101, 0
      %s104 = sadd.s32 %s103, 1
      %s105 = scalar_select %p102, %s103, %s104
      %p108 = pneg %p102
      %p109 = scmp.eq.s32.totalorder %s11, 1
      %p110 = por %p108, %p109
      %p111 = scmp.ne.s32.totalorder %s103, %s106
      %p112 = scmp.eq.s32.totalorder %s11, 0
      %p113 = por %p111, %p112
      %p114 = scmp.ne.s32.totalorder %s103, %s106
      %p115 = scmp.eq.s32.totalorder %s16, 1
      %p116 = por %p114, %p115
      %p117 = scmp.ne.s32.totalorder %s106, %s107
      %p118 = scmp.eq.s32.totalorder %s16, 0
      %p119 = por %p117, %p118
      %p120 = scmp.ne.s32.totalorder %s106, %s107
      %p121 = scmp.eq.s32.totalorder %s17, 1
      %p122 = por %p120, %p121
      %p124 = scmp.ne.s32.totalorder %s107, %s123
      %p125 = scmp.eq.s32.totalorder %s17, 0
      %p126 = por %p124, %p125
      %p127 = scmp.le.s32.totalorder 1, %s11
      %p128 = scmp.lt.s32.totalorder %s11, 3
      %p129 = pnand %p127, %p128
      %p130 = pneg %p129
      // Predicated region
      $region9: #{tpu_custom_call.1} parent=5 // pred_check
        _
      $region10: #{tpu_custom_call.1} parent=5 // pred_check_branch
        %132 = sbr.rel (%p129) target = $region12
      $region11: #{tpu_custom_call.1} parent=5 // pred_region
        %s133 = ssub.s32 %s11, 1
        // Predicated region
        $region13: #{tpu_custom_call.1} parent=11 // pred_check
          %p134 = pneg %p49
        $region14: #{tpu_custom_call.1} parent=11 // pred_check_branch
          %136 = sbr.rel (%p134) target = $region16
        $region15: #{tpu_custom_call.1} parent=11 // pred_region
          %s138 = ssub.s32 128, 128
          %139 = vsyncadd [#allocation4], %s138
          %s140 = smul.addr %s21, 128
          %s141 = scalar_lea.hbm %s0, %s140
          %s143 = sshll.u32 [#allocation3], 4
          %s144 = int_to_ptr.vmem [resolvable:$true] %s143
          %146 = dma.hbm_to_vmem [thread:$0]  %s141, 128, %s144, [#allocation4]
        $region16: #{tpu_custom_call.1} parent=11 // pred_fallthru
          _
        // Predicated region
        $region17: #{tpu_custom_call.1} parent=11 // pred_check
          %p147 = pneg %p70
        $region18: #{tpu_custom_call.1} parent=11 // pred_check_branch
          %149 = sbr.rel (%p147) target = $region20
        $region19: #{tpu_custom_call.1} parent=11 // pred_region
          %s151 = ssub.s32 256, 256
          %152 = vsyncadd [#allocation6], %s151
          %s153 = sshll.u32 [#allocation5], 4
          %s154 = int_to_ptr.vmem [resolvable:$true] %s153
          %159 = dma.hbm_to_vmem [thread:$0]  %s1, 256, %s154, [#allocation6], 64, 64, 4
        $region20: #{tpu_custom_call.1} parent=11 // pred_fallthru
          _
        // Predicated region
        $region21: #{tpu_custom_call.1} parent=11 // pred_check
          %p160 = pneg %p91
        $region22: #{tpu_custom_call.1} parent=11 // pred_check_branch
          %162 = sbr.rel (%p160) target = $region24
        $region23: #{tpu_custom_call.1} parent=11 // pred_region
          %s164 = ssub.s32 128, 128
          %165 = vsyncadd [#allocation6], %s164
          %s167 = sshll.u32 [#allocation7], 4
          %s168 = int_to_ptr.vmem [resolvable:$true] %s167
          %170 = dma.hbm_to_vmem [thread:$0]  %s2, 128, %s168, [#allocation6]
        $region24: #{tpu_custom_call.1} parent=11 // pred_fallthru
          _
      $region12: #{tpu_custom_call.1} parent=5 // pred_fallthru
        _
      %p171 = scmp.lt.s32.totalorder %s11, 2
      // Predicated region
      $region25: #{tpu_custom_call.1} parent=5 // pred_check
        %p172 = pneg %p171
      $region26: #{tpu_custom_call.1} parent=5 // pred_check_branch
        %174 = sbr.rel (%p172) target = $region28
      $region27: #{tpu_custom_call.1} parent=5 // pred_region
        _
      $region28: #{tpu_custom_call.1} parent=5 // pred_fallthru
        _
      %p175 = scmp.le.s32.totalorder 1, %s11
      %p176 = scmp.lt.s32.totalorder %s11, 3
      %p177 = pnand %p175, %p176
      %p178 = pneg %p177
      // Predicated region
      $region29: #{tpu_custom_call.1} parent=5 // pred_check
        _
      $region30: #{tpu_custom_call.1} parent=5 // pred_check_branch
        %180 = sbr.rel (%p177) target = $region32
      $region31: #{tpu_custom_call.1} parent=5 // pred_region
        %s181 = ssub.s32 %s11, 1
        // Predicated region
        $region33: #{tpu_custom_call.1} parent=31 // pred_check
          %p182 = pneg %p49
        $region34: #{tpu_custom_call.1} parent=31 // pred_check_branch
          %184 = sbr.rel (%p182) target = $region36
        $region35: #{tpu_custom_call.1} parent=31 // pred_region
          %185 = dma.done [#allocation4], 128
        $region36: #{tpu_custom_call.1} parent=31 // pred_fallthru
          _
        // Predicated region
        $region37: #{tpu_custom_call.1} parent=31 // pred_check
          %p186 = pneg %p70
        $region38: #{tpu_custom_call.1} parent=31 // pred_check_branch
          %188 = sbr.rel (%p186) target = $region40
        $region39: #{tpu_custom_call.1} parent=31 // pred_region
          %189 = dma.done [#allocation6], 256
        $region40: #{tpu_custom_call.1} parent=31 // pred_fallthru
          _
        // Predicated region
        $region41: #{tpu_custom_call.1} parent=31 // pred_check
          %p190 = pneg %p91
        $region42: #{tpu_custom_call.1} parent=31 // pred_check_branch
          %192 = sbr.rel (%p190) target = $region44
        $region43: #{tpu_custom_call.1} parent=31 // pred_region
          %193 = dma.done [#allocation6], 128
        $region44: #{tpu_custom_call.1} parent=31 // pred_fallthru
          _
        %p194 = pneg %p49
        %p195 = pneg %p46
        %p196 = pneg %p70
        %p197 = pneg %p67
        %p198 = pneg %p91
        %p199 = pneg %p88
        %p200 = pneg %p119
        %p201 = pneg %p116
        %s202 = smul.u32 %s20, %s21
        %p203 = scmp.lt.s32.totalorder %s202, 0
        %s204 = scalar_select %p203, %s202, 0
        %s205 = smul.addr %s204, 8
        %s206 = scalar_lea.vmem %s3, %s205
        %s207 = smul.u32 %s20, %s21
        %p208 = scmp.lt.s32.totalorder %s207, 0
        %s209 = scalar_select %p208, %s207, 0
        %s210 = smul.addr %s209, 8
        %s211 = scalar_lea.vmem %s3, %s210
        %s212 = smul.u32 %s20, %s21
        %v214 = vld [vmem:[#allocation3] sm:$0xff]
        %v215 = vpack.c.bf16 %v214, %v214
        %v216 = vld [vmem:[#allocation5] sm:$0xf]
        %v217 = vld [vmem:[#allocation5 + $0x4] sm:$0xf]
        %v218 = vld [vmem:[#allocation5 + $0x8] sm:$0xf]
        %v219 = vld [vmem:[#allocation5 + $0xc] sm:$0xf]
        %v220 = vld [vmem:[#allocation7] sm:$0x1]
        %v221 = vlaneseq
        %v222 = vshrl.u32 %v221, 7
        %v223 = vsub.s32 0, %v222
        %v224 = vrot.slane %v220, %v223
        %v229 = vunpack.c.l.b16 %v216
        %v230 = vunpack.c.l.b16 %v217
        %v231 = vunpack.c.l.b16 %v218
        %v232 = vunpack.c.l.b16 %v219
        %v233 = vpack.c.b16 %v230, %v229
        %v234 = vpack.c.b16 %v232, %v231
        %vm237 = vcmask 261120
        %v239 = vsel %vm237, %v215, 0
        %241 = vmatprep.subr.bf16.mxu0 0
        %242 = vmatpush1.bf16.msra.mxu0 %v233
        %243 = vmatprep.subr.bf16.mxu0 0
        %244 = vmatpush1.bf16.msra.mxu0 %v234
        %245 = vmatprep.subr.bf16.mxu0 0
        %246 = vmatpush1.bf16.msra.mxu0 0
        %247 = vmatprep.subr.bf16.mxu0 0
        %248 = vmatpush1.bf16.msra.mxu0 0
        %249 = vmatprep.subr.bf16.mxu0 0
        %250 = vmatpush1.bf16.msra.mxu0 0
        %251 = vmatprep.subr.bf16.mxu0 0
        %252 = vmatpush1.bf16.msra.mxu0 0
        %253 = vmatprep.subr.bf16.mxu0 0
        %254 = vmatpush1.bf16.msra.mxu0 0
        %255 = vmatprep.subr.bf16.mxu0 0
        %256 = vmatpush1.bf16.msra.mxu0 0
        %257 = vmatprep.subr.bf16.mxu0 0
        %258 = vmatpush1.bf16.msra.mxu0 0
        %259 = vmatprep.subr.bf16.mxu0 0
        %260 = vmatpush1.bf16.msra.mxu0 0
        %261 = vmatprep.subr.bf16.mxu0 0
        %262 = vmatpush1.bf16.msra.mxu0 0
        %263 = vmatprep.subr.bf16.mxu0 0
        %264 = vmatpush1.bf16.msra.mxu0 0
        %265 = vmatprep.subr.bf16.mxu0 0
        %266 = vmatpush1.bf16.msra.mxu0 0
        %267 = vmatprep.subr.bf16.mxu0 0
        %268 = vmatpush1.bf16.msra.mxu0 0
        %269 = vmatprep.subr.bf16.mxu0 0
        %270 = vmatpush1.bf16.msra.mxu0 0
        %271 = vmatprep.subr.bf16.mxu0 0
        %272 = vmatpush1.bf16.msra.mxu0 0
        %273 = vmatprep.mubr.bf16.mxu0 0
        %274 = vmatmul.mubr.bf16.gmra.mrb[0].mxu0 %v239
        %v275 = vpop.f32.mrb[0].mxu0
        %v276 = vadd.f32 %v224, %v275
        %v277 = vpop.f32.mrb[0].mxu0
        %v278 = vpop.f32.mrb[0].mxu0
        %v279 = vpop.f32.mrb[0].mxu0
        %280 = vdwg.mxu0
        %vm281 = vcmp.gt.f32.partialorder %v276, 0.0
        %v282 = vmul.f32 %v276, 1.442695
        %v283 = vpow.pop %v282
        %v284 = vsub.f32 %v283, 1.0
        %v285 = vmul.f32 %v284, 0.1
        %v286 = vsel %vm281, %v276, %v285
        %p287 = scmp.eq.s32.totalorder %s20, 0
        // Predicated region
        $region45: #{tpu_custom_call.1} parent=31 // pred_check
          %p288 = pneg %p287
        $region46: #{tpu_custom_call.1} parent=31 // pred_check_branch
          %290 = sbr.rel (%p288) target = $region48
        $region47: #{tpu_custom_call.1} parent=31 // pred_region
          %p291 = scmp.eq.s32.totalorder %s21, 0
          // Predicated region
          $region49: #{tpu_custom_call.1} parent=47 // pred_check
            %p292 = pneg %p291
          $region50: #{tpu_custom_call.1} parent=47 // pred_check_branch
            %294 = sbr.rel (%p292) target = $region52
          $region51: #{tpu_custom_call.1} parent=47 // pred_region
            %295 = vst [vmem:[#allocation2] sm:$0x3] 0.0
          $region52: #{tpu_custom_call.1} parent=47 // pred_fallthru
            _
          %s296 = smul.u32 %s21, 8
          %v297 = vlaneseq
          %v298 = vshrl.u32 %v297, 7
          %v299 = vstv %s296
          %v300 = vadd.s32 %v299, %v298
          %vm301 = vcmp.lt.s32.totalorder %v300, 8
          %v302 = vsel %vm301, 1, 0
          %vm303 = vcmp.eq.s32.totalorder %v302, 1
          %v304 = vsel %vm303, %v286, 0.0
          %v305 = vld [vmem:[#allocation2] sm:$0x1]
          %v306 = vrot.slane %v304, 4
          %v307 = vadd.f32 %v304, %v306
          %v308 = vrot.slane %v307, 2
          %v309 = vadd.f32 %v307, %v308
          %v310 = vrot.slane %v309, 1
          %v311 = vadd.f32 %v309, %v310
          %v312 = vadd.f32 %v305, %v311
          %313 = vst [vmem:[#allocation2] sm:$0x1] %v312
          %v314 = vld [vmem:[#allocation2 + $0x1] sm:$0x1]
          %v315 = vmul.f32 %v304, %v304
          %v316 = vrot.slane %v315, 4
          %v317 = vadd.f32 %v315, %v316
          %v318 = vrot.slane %v317, 2
          %v319 = vadd.f32 %v317, %v318
          %v320 = vrot.slane %v319, 1
          %v321 = vadd.f32 %v319, %v320
          %v322 = vadd.f32 %v314, %v321
          %323 = vst [vmem:[#allocation2 + $0x1] sm:$0x1] %v322
        $region48: #{tpu_custom_call.1} parent=31 // pred_fallthru
          _
        %p324 = scmp.eq.s32.totalorder %s20, 1
        // Predicated region
        $region53: #{tpu_custom_call.1} parent=31 // pred_check
          %p325 = pneg %p324
        $region54: #{tpu_custom_call.1} parent=31 // pred_check_branch
          %327 = sbr.rel (%p325) target = $region56
        $region55: #{tpu_custom_call.1} parent=31 // pred_region
          %v328 = vld [vmem:[#allocation2] sm:$0x1]
          %v329 = vmul.f32 %v328, 0.125
          %v330 = vld [vmem:[#allocation2 + $0x1] sm:$0x1]
          %v331 = vmul.f32 %v330, 0.125
          %v332 = vmul.f32 %v329, %v329
          %v333 = vsub.f32 %v331, %v332
          %v334 = vmax.f32 %v333, 0.0
          %v335 = vld [vmem:[#allocation7 + $0x1] sm:$0x1]
          %v336 = vld [vmem:[#allocation7 + $0x2] sm:$0x1]
          %v337 = vld [vmem:[#allocation7 + $0x3] sm:$0x1]
          %v338 = vadd.f32 %v334, 1e-05
          %v339 = vrsqrt.pop %v338
          %v340 = vmul.f32 %v339, %v335
          %v341 = vmul.f32 %v340, %v337
          %v342 = vmul.f32 %v329, %v340
          %v343 = vsub.f32 %v336, %v342
          %v344 = vmul.f32 %v343, %v337
          %v345 = vld [vmem:[#allocation7 + $0x4] sm:$0x1]
          %v346 = vadd.f32 %v344, %v345
          %vm347 = vcmask 1040384
          %v348 = vsel %vm347, %v346, 0.0
          %349 = vadd.xlane.f32.xlu0 %v348
          %v350 = vpop.xlane.xlu0 %349
          %v351 = vlaneseq
          %v352 = vshrl.u32 %v351, 7
          %v353 = vsub.s32 0, %v352
          %v354 = vrot.slane %v341, %v353
          %v355 = vmul.f32 %v286, %v354
          %356 = vadd.xlane.f32.xlu0 %v355
          %v357 = vpop.xlane.xlu0 %356
          %v358 = vlaneseq
          %v359 = vshrl.u32 %v358, 7
          %v360 = vsub.s32 0, %v359
          %v361 = vrot.slane %v350, %v360
          %v362 = vadd.f32 %v357, %v361
          %vm363 = vcmask 7168
          %364 = vst.msk [vmem:[%s211] sm:$0xff] %vm363, %v362
        $region56: #{tpu_custom_call.1} parent=31 // pred_fallthru
          _
        %s365 = smul.u32 %s20, %s21
        %p366 = scmp.lt.s32.totalorder %s365, 0
        %s367 = scalar_select %p366, %s365, 0
        %s368 = smul.addr %s367, 8
        %s369 = scalar_lea.vmem %s3, %s368
        // Predicated region
        $region57: #{tpu_custom_call.1} parent=31 // pred_check
          %p370 = pneg %p116
        $region58: #{tpu_custom_call.1} parent=31 // pred_check_branch
          %372 = sbr.rel (%p370) target = $region60
        $region59: #{tpu_custom_call.1} parent=31 // pred_region
          %s373 = smul.u32 %s20, %s21
        $region60: #{tpu_custom_call.1} parent=31 // pred_fallthru
          _
      $region32: #{tpu_custom_call.1} parent=5 // pred_fallthru
        _
      %p374 = scmp.le.s32.totalorder 2, %s11
      // Predicated region
      $region61: #{tpu_custom_call.1} parent=5 // pred_check
        %p375 = pneg %p374
      $region62: #{tpu_custom_call.1} parent=5 // pred_check_branch
        %377 = sbr.rel (%p375) target = $region64
      $region63: #{tpu_custom_call.1} parent=5 // pred_region
        %s378 = ssub.s32 %s11, 2
        // Predicated region
        $region65: #{tpu_custom_call.1} parent=63 // pred_check
          %p379 = pneg %p122
        $region66: #{tpu_custom_call.1} parent=63 // pred_check_branch
          %381 = sbr.rel (%p379) target = $region68
        $region67: #{tpu_custom_call.1} parent=63 // pred_region
          %s382 = smul.u32 %s22, %s23
          %p383 = scmp.lt.s32.totalorder %s382, 0
          %s384 = scalar_select %p383, %s382, 0
          %s385 = smul.addr %s384, 8
          %s386 = scalar_lea.vmem %s3, %s385
        $region68: #{tpu_custom_call.1} parent=63 // pred_fallthru
          _
      $region64: #{tpu_custom_call.1} parent=5 // pred_fallthru
        _
    $region6: #{tpu_custom_call.1} parent=1 // loop_footer
      %s15 = sadd.s32 1, %s11
    $region7: #{tpu_custom_call.1} parent=1 // loop_footer_branch
      %10 = sbr.rel target = $region3
    $region8: #{tpu_custom_call.1} parent=1 // loop_exit
      _
    %387 = vsyncpa [#allocation4], 1
    %s388 = scalar_lea.sflag [#allocation4], 1
    %389 = vsyncpa %s388, 1
    %390 = vsyncpa [#allocation6], 1

</llo_original>
